<compile_context>
chip_gen: v6e
topology: v6e:2x2x1
jax: 0.10.0
libtpu: 0.0.40
codegen_flags: <defaults>
</compile_context>

<pallas_src>
import jax
import jax.numpy as jnp
from jax.experimental import pallas as pl
from jax.experimental.pallas import tpu as pltpu

# Logical sizes (PyTorch Net) and lane-aligned padded output sizes.
D_IN, H0, H1, D_OUT = 784, 98, 64, 10
H0_P, H1_P, D_OUT_P = 128, 128, 128  # multiples of 128 (lane width)


def mlp_stats_kernel(x_ref, w0_ref, b0_ref, w1_ref, b1_ref, w2_ref, b2_ref,
                     logits_ref, lse_ref, m_sc, s_sc):
    """Per batch tile: 3-layer MLP -> logits tile + online dim=0 softmax stats.

    x:(TB,784) f32 | w*: bf16 (784,128)/(128,128)/(128,128) | b*: (1,128) f32
    logits:(TB,128) f32 | lse:(1,128) f32 (written on last grid step only)
    m_sc/s_sc: (1,128) f32 running column max / sum-of-exp scratch.
    """
    i = pl.program_id(0)

    @pl.when(i == 0)
    def _():
        m_sc[...] = jnp.full(m_sc.shape, -jnp.inf, dtype=m_sc.dtype)
        s_sc[...] = jnp.zeros(s_sc.shape, dtype=s_sc.dtype)

    # bf16 MXU operands, f32 accumulation; biases added in f32 (VALU slack).
    x = x_ref[...].astype(jnp.bfloat16)
    h0 = jnp.dot(x, w0_ref[...], preferred_element_type=jnp.float32) + b0_ref[...]
    h0 = jnp.maximum(h0, 0.0)

    h1 = jnp.dot(h0.astype(jnp.bfloat16), w1_ref[...],
                 preferred_element_type=jnp.float32) + b1_ref[...]
    h1 = jnp.maximum(h1, 0.0)

    logits = jnp.dot(h1.astype(jnp.bfloat16), w2_ref[...],
                     preferred_element_type=jnp.float32) + b2_ref[...]
    logits_ref[...] = logits

    # Online per-column (dim=0) max / sum-of-exp across batch tiles; exp/log
    # stay in f32 on the EUP (free relative to the MXU work).
    tile_max = jnp.max(logits, axis=0, keepdims=True)
    m_new = jnp.maximum(m_sc[...], tile_max)
    s_sc[...] = (s_sc[...] * jnp.exp(m_sc[...] - m_new)
                 + jnp.sum(jnp.exp(logits - m_new), axis=0, keepdims=True))
    m_sc[...] = m_new

    @pl.when(i == pl.num_programs(0) - 1)
    def _():
        lse_ref[...] = m_sc[...] + jnp.log(s_sc[...])


def finalize_kernel(logits_ref, lse_ref, o_ref):
    """Per batch tile: log_softmax(dim=0) finalize = logits - column lse."""
    o_ref[...] = logits_ref[...] - lse_ref[...]


def pack_params(params):
    """Pad weights to 128-lane output widths (bf16) and biases to (1,128) f32."""
    w0, b0, w1, b1, w2, b2 = params

    w0p = jnp.zeros((D_IN, H0_P), jnp.float32).at[:, :H0].set(w0).astype(jnp.bfloat16)
    w1p = jnp.zeros((H0_P, H1_P), jnp.float32).at[:H0, :H1].set(w1).astype(jnp.bfloat16)
    w2p = jnp.zeros((H1_P, D_OUT_P), jnp.float32).at[:H1, :D_OUT].set(w2).astype(jnp.bfloat16)

    b0p = jnp.zeros((1, H0_P), jnp.float32).at[0, :H0].set(b0)
    b1p = jnp.zeros((1, H1_P), jnp.float32).at[0, :H1].set(b1)
    b2p = jnp.zeros((1, D_OUT_P), jnp.float32).at[0, :D_OUT].set(b2)

    return (w0p, b0p, w1p, b1p, w2p, b2p)


def _pick_tile_b(B):
    # v6e/v7x: >=256 rows fills the 256-wide MXU; v5e: 128 suffices.  Cap at
    # 512 so per-tile VMEM stays small even on v7x's 64 MiB VMEM.
    for t in (512, 256, 128, 64, 32, 16, 8):
        if t <= B and B % t == 0:
            return t
    return B  # single full-batch tile (block dim == full array dim is legal)


def net_forward(x, packed_params, *, tile_b=None):
    """x: (B, 1, 28, 28) or (B, 784), float32. Returns (B, 10) f32 log-probs."""
    B = x.shape[0]
    w0p, b0p, w1p, b1p, w2p, b2p = packed_params

    x2d = x.reshape(B, D_IN)  # view-like reshape; bf16 cast happens in-kernel
    if tile_b is None:
        tile_b = _pick_tile_b(B)
    assert B % tile_b == 0 and (tile_b % 8 == 0 or tile_b == B), (B, tile_b)
    n_tiles = B // tile_b

    resident = lambda shape: pl.BlockSpec(shape, lambda i: (0, 0))

    # --- Pass 1: MLP + online dim=0 softmax stats (sequential batch axis) ---
    flops1 = 2 * B * (D_IN * H0_P + H0_P * H1_P + H1_P * D_OUT_P)
    bytes1 = (x2d.size * x2d.dtype.itemsize
              + (w0p.size + w1p.size + w2p.size) * 2
              + (b0p.size + b1p.size + b2p.size) * 4
              + B * D_OUT_P * 4 + D_OUT_P * 4)
    cost1 = pl.CostEstimate(flops=flops1,
                            transcendentals=B * D_OUT_P + D_OUT_P,
                            bytes_accessed=bytes1)

    logits, lse = pl.pallas_call(
        mlp_stats_kernel,
        out_shape=(jax.ShapeDtypeStruct((B, D_OUT_P), jnp.float32),
                   jax.ShapeDtypeStruct((1, D_OUT_P), jnp.float32)),
        grid_spec=pltpu.PrefetchScalarGridSpec(
            num_scalar_prefetch=0,
            grid=(n_tiles,),
            in_specs=[
                pl.BlockSpec((tile_b, D_IN), lambda i: (i, 0)),   # x tile
                resident(w0p.shape), resident(b0p.shape),          # weights /
                resident(w1p.shape), resident(b1p.shape),          # biases stay
                resident(w2p.shape), resident(b2p.shape),          # VMEM-resident
            ],
            out_specs=[
                pl.BlockSpec((tile_b, D_OUT_P), lambda i: (i, 0)),  # logits tile
                pl.BlockSpec((1, D_OUT_P), lambda i: (0, 0)),       # lse (resident)
            ],
            scratch_shapes=[pltpu.VMEM((1, D_OUT_P), jnp.float32),   # running max
                            pltpu.VMEM((1, D_OUT_P), jnp.float32)],  # running sumexp
        ),
        compiler_params=pltpu.CompilerParams(
            dimension_semantics=("arbitrary",)),   # cross-tile reduction order
        cost_estimate=cost1,
    )(x2d, w0p, b0p, w1p, b1p, w2p, b2p)

    # --- Pass 2: subtract lse (parallel batch axis, trivially cheap) ---
    cost2 = pl.CostEstimate(flops=B * D_OUT_P, transcendentals=0,
                            bytes_accessed=2 * B * D_OUT_P * 4 + D_OUT_P * 4)
    out_pad = pl.pallas_call(
        finalize_kernel,
        out_shape=jax.ShapeDtypeStruct((B, D_OUT_P), jnp.float32),
        grid=(n_tiles,),
        in_specs=[pl.BlockSpec((tile_b, D_OUT_P), lambda i: (i, 0)),
                  pl.BlockSpec((1, D_OUT_P), lambda i: (0, 0))],
        out_specs=pl.BlockSpec((tile_b, D_OUT_P), lambda i: (i, 0)),
        compiler_params=pltpu.CompilerParams(
            dimension_semantics=("parallel",)),
        cost_estimate=cost2,
    )(logits, lse)

    # Padded columns 10..127 are inert (zero logits, independent under the
    # dim=0 softmax); slice out the real log-probs.
    return out_pad[:, :D_OUT]


def init_params(key):
    """Deterministic params matching nn.Linear shapes (stored pre-transposed)."""
    dims = [(D_IN, H0), (H0, H1), (H1, D_OUT)]
    params = []
    for i, (din, dout) in enumerate(dims):
        kw, kb = jax.random.split(jax.random.fold_in(key, i))
        bound = 1.0 / (din ** 0.5)  # PyTorch nn.Linear default init range
        w = jax.random.uniform(kw, (din, dout), jnp.float32, -bound, bound)
        b = jax.random.uniform(kb, (dout,), jnp.float32, -bound, bound)
        params += [w, b]
    return tuple(params)


def net_forward_ref(x, params):
    """Plain-JAX reference mirroring kernel numerics (bf16 operands, f32 acc/bias)."""
    B = x.shape[0]
    w0, b0, w1, b1, w2, b2 = params
    bf = jnp.bfloat16
    h = x.reshape(B, -1).astype(bf)
    h = jnp.maximum(
        jnp.dot(h, w0.astype(bf), preferred_element_type=jnp.float32) + b0, 0.0)
    h = jnp.maximum(
        jnp.dot(h.astype(bf), w1.astype(bf), preferred_element_type=jnp.float32) + b1, 0.0)
    logits = (jnp.dot(h.astype(bf), w2.astype(bf), preferred_element_type=jnp.float32)
              + b2)
    return jax.nn.log_softmax(logits, axis=0)


if __name__ == "__main__":
    key = jax.random.PRNGKey(0)
    params = init_params(key)
    packed = pack_params(params)

    # Batch of MNIST-shaped inputs (NCHW like PyTorch).  tile_b=32 forces a
    # multi-tile grid so the cross-tile dim=0 log-softmax path is exercised;
    # production batches would use the auto-picked 256-512 tile.
    B = 128
    x = jax.random.normal(jax.random.fold_in(key, 100), (B, 1, 28, 28), jnp.float32)

    out = jax.block_until_ready(net_forward(x, packed, tile_b=32))
    ref = net_forward_ref(x, params)

    assert out.shape == (B, D_OUT)
    max_err = float(jnp.max(jnp.abs(out - ref)))
    assert bool(jnp.allclose(out, ref, atol=1e-3, rtol=1e-3)), f"max err {max_err}"

    print("KERNEL_OK")
</pallas_src>

<mosaic_0001>
module attributes {stable_mosaic.version = 11 : i64} {
  func.func @mlp_stats_kernel(%arg0: i32, %arg1: memref<32x784xf32, #tpu.memory_space<vmem>>, %arg2: memref<784x128xbf16, #tpu.memory_space<vmem>>, %arg3: memref<1x128xf32, #tpu.memory_space<vmem>>, %arg4: memref<128x128xbf16, #tpu.memory_space<vmem>>, %arg5: memref<1x128xf32, #tpu.memory_space<vmem>>, %arg6: memref<128x128xbf16, #tpu.memory_space<vmem>>, %arg7: memref<1x128xf32, #tpu.memory_space<vmem>>, %arg8: memref<32x128xf32, #tpu.memory_space<vmem>>, %arg9: memref<1x128xf32, #tpu.memory_space<vmem>>, %arg10: memref<1x128xf32, #tpu.memory_space<vmem>>, %arg11: memref<1x128xf32, #tpu.memory_space<vmem>>) attributes {dimension_semantics = [#tpu.dimension_semantics<arbitrary>], iteration_bounds = array<i64: 4>, scalar_prefetch = 0 : i64, scratch_operands = 2 : i64, tpu.core_type = #tpu.core_type<tc>, window_params = [{transform_indices = @transform_0, window_bounds = array<i64: 32, 784>}, {pipeline_mode = #tpu.pipeline_mode<synchronous>, transform_indices = @transform_1, window_bounds = array<i64: 784, 128>}, {pipeline_mode = #tpu.pipeline_mode<synchronous>, transform_indices = @transform_2, window_bounds = array<i64: 1, 128>}, {pipeline_mode = #tpu.pipeline_mode<synchronous>, transform_indices = @transform_3, window_bounds = array<i64: 128, 128>}, {pipeline_mode = #tpu.pipeline_mode<synchronous>, transform_indices = @transform_4, window_bounds = array<i64: 1, 128>}, {pipeline_mode = #tpu.pipeline_mode<synchronous>, transform_indices = @transform_5, window_bounds = array<i64: 128, 128>}, {pipeline_mode = #tpu.pipeline_mode<synchronous>, transform_indices = @transform_6, window_bounds = array<i64: 1, 128>}, {transform_indices = @transform_7, window_bounds = array<i64: 32, 128>}, {pipeline_mode = #tpu.pipeline_mode<synchronous>, transform_indices = @transform_8, window_bounds = array<i64: 1, 128>}]} {
    %c0_i32 = arith.constant 0 : i32
    %0 = arith.cmpi eq, %arg0, %c0_i32 : i32
    %1 = arith.extui %0 : i1 to i32
    %c0_i32_0 = arith.constant 0 : i32
    %2 = arith.cmpi ne, %1, %c0_i32_0 : i32
    scf.if %2 {
      %cst_33 = arith.constant 0xFF800000 : f32
      %47 = vector.broadcast %cst_33 : f32 to vector<1x128xf32>
      %c0_34 = arith.constant 0 : index
      %c0_35 = arith.constant 0 : index
      %48 = vector.load %arg10[%c0_34, %c0_35] : memref<1x128xf32, #tpu.memory_space<vmem>>, vector<1x128xf32>
      tpu.vector_store %arg10[%c0_34, %c0_35], %47 {strides = array<i32>} : memref<1x128xf32, #tpu.memory_space<vmem>>, vector<1x128xf32>,
      %cst_36 = arith.constant 0.000000e+00 : f32
      %49 = vector.broadcast %cst_36 : f32 to vector<1x128xf32>
      %c0_37 = arith.constant 0 : index
      %c0_38 = arith.constant 0 : index
      %50 = vector.load %arg11[%c0_37, %c0_38] : memref<1x128xf32, #tpu.memory_space<vmem>>, vector<1x128xf32>
      tpu.vector_store %arg11[%c0_37, %c0_38], %49 {strides = array<i32>} : memref<1x128xf32, #tpu.memory_space<vmem>>, vector<1x128xf32>,
    } else {
    }
    %c0 = arith.constant 0 : index
    %c0_1 = arith.constant 0 : index
    %3 = vector.load %arg1[%c0, %c0_1] : memref<32x784xf32, #tpu.memory_space<vmem>>, vector<32x784xf32>
    %4 = arith.truncf %3 : vector<32x784xf32> to vector<32x784xbf16>
    %c0_2 = arith.constant 0 : index
    %c0_3 = arith.constant 0 : index
    %5 = vector.load %arg2[%c0_2, %c0_3] : memref<784x128xbf16, #tpu.memory_space<vmem>>, vector<784x128xbf16>
    %cst = arith.constant dense<0.000000e+00> : vector<32x128xf32>
    %6 = tpu.matmul %4, %5, %cst {dimension_numbers = #tpu.dot_dimension_numbers<[1], [0], [0], [1], [0, 0, 1, 1], [], []>} : vector<32x784xbf16>, vector<784x128xbf16>, vector<32x128xf32> -> vector<32x128xf32>
    %c0_4 = arith.constant 0 : index
    %c0_5 = arith.constant 0 : index
    %7 = vector.load %arg3[%c0_4, %c0_5] : memref<1x128xf32, #tpu.memory_space<vmem>>, vector<1x128xf32>
    %8 = vector.broadcast %7 : vector<1x128xf32> to vector<32x128xf32>
    %9 = arith.addf %6, %8 : vector<32x128xf32>
    %cst_6 = arith.constant 0.000000e+00 : f32
    %10 = vector.broadcast %cst_6 : f32 to vector<32x128xf32>
    %11 = arith.maximumf %9, %10 : vector<32x128xf32>
    %12 = arith.truncf %11 : vector<32x128xf32> to vector<32x128xbf16>
    %c0_7 = arith.constant 0 : index
    %c0_8 = arith.constant 0 : index
    %13 = vector.load %arg4[%c0_7, %c0_8] : memref<128x128xbf16, #tpu.memory_space<vmem>>, vector<128x128xbf16>
    %cst_9 = arith.constant dense<0.000000e+00> : vector<32x128xf32>
    %14 = tpu.matmul %12, %13, %cst_9 {dimension_numbers = #tpu.dot_dimension_numbers<[1], [0], [0], [1], [0, 0, 1, 1], [], []>} : vector<32x128xbf16>, vector<128x128xbf16>, vector<32x128xf32> -> vector<32x128xf32>
    %c0_10 = arith.constant 0 : index
    %c0_11 = arith.constant 0 : index
    %15 = vector.load %arg5[%c0_10, %c0_11] : memref<1x128xf32, #tpu.memory_space<vmem>>, vector<1x128xf32>
    %16 = vector.broadcast %15 : vector<1x128xf32> to vector<32x128xf32>
    %17 = arith.addf %14, %16 : vector<32x128xf32>
    %cst_12 = arith.constant 0.000000e+00 : f32
    %18 = vector.broadcast %cst_12 : f32 to vector<32x128xf32>
    %19 = arith.maximumf %17, %18 : vector<32x128xf32>
    %20 = arith.truncf %19 : vector<32x128xf32> to vector<32x128xbf16>
    %c0_13 = arith.constant 0 : index
    %c0_14 = arith.constant 0 : index
    %21 = vector.load %arg6[%c0_13, %c0_14] : memref<128x128xbf16, #tpu.memory_space<vmem>>, vector<128x128xbf16>
    %cst_15 = arith.constant dense<0.000000e+00> : vector<32x128xf32>
    %22 = tpu.matmul %20, %21, %cst_15 {dimension_numbers = #tpu.dot_dimension_numbers<[1], [0], [0], [1], [0, 0, 1, 1], [], []>} : vector<32x128xbf16>, vector<128x128xbf16>, vector<32x128xf32> -> vector<32x128xf32>
    %c0_16 = arith.constant 0 : index
    %c0_17 = arith.constant 0 : index
    %23 = vector.load %arg7[%c0_16, %c0_17] : memref<1x128xf32, #tpu.memory_space<vmem>>, vector<1x128xf32>
    %24 = vector.broadcast %23 : vector<1x128xf32> to vector<32x128xf32>
    %25 = arith.addf %22, %24 : vector<32x128xf32>
    %c0_18 = arith.constant 0 : index
    %c0_19 = arith.constant 0 : index
    %26 = vector.load %arg8[%c0_18, %c0_19] : memref<32x128xf32, #tpu.memory_space<vmem>>, vector<32x128xf32>
    tpu.vector_store %arg8[%c0_18, %c0_19], %25 {strides = array<i32>} : memref<32x128xf32, #tpu.memory_space<vmem>>, vector<32x128xf32>,
    %cst_20 = arith.constant dense<0xFF800000> : vector<128xf32>
    %27 = vector.multi_reduction <maximumf>, %25, %cst_20 [0] : vector<32x128xf32> to vector<128xf32>
    %28 = vector.shape_cast %27 : vector<128xf32> to vector<1x128xf32>
    %c0_21 = arith.constant 0 : index
    %c0_22 = arith.constant 0 : index
    %29 = vector.load %arg10[%c0_21, %c0_22] : memref<1x128xf32, #tpu.memory_space<vmem>>, vector<1x128xf32>
    %30 = arith.maximumf %29, %28 : vector<1x128xf32>
    %c0_23 = arith.constant 0 : index
    %c0_24 = arith.constant 0 : index
    %31 = vector.load %arg11[%c0_23, %c0_24] : memref<1x128xf32, #tpu.memory_space<vmem>>, vector<1x128xf32>
    %c0_25 = arith.constant 0 : index
    %c0_26 = arith.constant 0 : index
    %32 = vector.load %arg10[%c0_25, %c0_26] : memref<1x128xf32, #tpu.memory_space<vmem>>, vector<1x128xf32>
    %33 = arith.subf %32, %30 : vector<1x128xf32>
    %34 = math.exp %33 : vector<1x128xf32>
    %35 = arith.mulf %31, %34 : vector<1x128xf32>
    %36 = vector.broadcast %30 : vector<1x128xf32> to vector<32x128xf32>
    %37 = arith.subf %25, %36 : vector<32x128xf32>
    %38 = math.exp %37 : vector<32x128xf32>
    %cst_27 = arith.constant dense<0.000000e+00> : vector<128xf32>
    %39 = vector.multi_reduction <add>, %38, %cst_27 [0] : vector<32x128xf32> to vector<128xf32>
    %40 = vector.shape_cast %39 : vector<128xf32> to vector<1x128xf32>
    %41 = arith.addf %35, %40 : vector<1x128xf32>
    %c0_28 = arith.constant 0 : index
    %c0_29 = arith.constant 0 : index
    %42 = vector.load %arg11[%c0_28, %c0_29] : memref<1x128xf32, #tpu.memory_space<vmem>>, vector<1x128xf32>
    tpu.vector_store %arg11[%c0_28, %c0_29], %41 {strides = array<i32>} : memref<1x128xf32, #tpu.memory_space<vmem>>, vector<1x128xf32>,
    %c0_30 = arith.constant 0 : index
    %c0_31 = arith.constant 0 : index
    %43 = vector.load %arg10[%c0_30, %c0_31] : memref<1x128xf32, #tpu.memory_space<vmem>>, vector<1x128xf32>
    tpu.vector_store %arg10[%c0_30, %c0_31], %30 {strides = array<i32>} : memref<1x128xf32, #tpu.memory_space<vmem>>, vector<1x128xf32>,
    %c3_i32 = arith.constant 3 : i32
    %44 = arith.cmpi eq, %arg0, %c3_i32 : i32
    %45 = arith.extui %44 : i1 to i32
    %c0_i32_32 = arith.constant 0 : i32
    %46 = arith.cmpi ne, %45, %c0_i32_32 : i32
    scf.if %46 {
      %c0_33 = arith.constant 0 : index
      %c0_34 = arith.constant 0 : index
      %47 = vector.load %arg10[%c0_33, %c0_34] : memref<1x128xf32, #tpu.memory_space<vmem>>, vector<1x128xf32>
      %c0_35 = arith.constant 0 : index
      %c0_36 = arith.constant 0 : index
      %48 = vector.load %arg11[%c0_35, %c0_36] : memref<1x128xf32, #tpu.memory_space<vmem>>, vector<1x128xf32>
      %49 = math.log %48 : vector<1x128xf32>
      %50 = arith.addf %47, %49 : vector<1x128xf32>
      %c0_37 = arith.constant 0 : index
      %c0_38 = arith.constant 0 : index
      %51 = vector.load %arg9[%c0_37, %c0_38] : memref<1x128xf32, #tpu.memory_space<vmem>>, vector<1x128xf32>
      tpu.vector_store %arg9[%c0_37, %c0_38], %50 {strides = array<i32>} : memref<1x128xf32, #tpu.memory_space<vmem>>, vector<1x128xf32>,
    } else {
    }
    return
  }
  func.func @transform_0(%arg0: i32) -> (i32, i32) {
    %c0_i32 = arith.constant 0 : i32
    %c0_i32_0 = arith.constant 0 : i32
    return %arg0, %c0_i32 : i32, i32
  }
  func.func @transform_1(%arg0: i32) -> (i32, i32) {
    %c0_i32 = arith.constant 0 : i32
    %c0_i32_0 = arith.constant 0 : i32
    %c0_i32_1 = arith.constant 0 : i32
    return %c0_i32, %c0_i32_0 : i32, i32
  }
  func.func @transform_2(%arg0: i32) -> (i32, i32) {
    %c0_i32 = arith.constant 0 : i32
    %c0_i32_0 = arith.constant 0 : i32
    %c0_i32_1 = arith.constant 0 : i32
    return %c0_i32, %c0_i32_0 : i32, i32
  }
  func.func @transform_3(%arg0: i32) -> (i32, i32) {
    %c0_i32 = arith.constant 0 : i32
    %c0_i32_0 = arith.constant 0 : i32
    %c0_i32_1 = arith.constant 0 : i32
    return %c0_i32, %c0_i32_0 : i32, i32
  }
  func.func @transform_4(%arg0: i32) -> (i32, i32) {
    %c0_i32 = arith.constant 0 : i32
    %c0_i32_0 = arith.constant 0 : i32
    %c0_i32_1 = arith.constant 0 : i32
    return %c0_i32, %c0_i32_0 : i32, i32
  }
  func.func @transform_5(%arg0: i32) -> (i32, i32) {
    %c0_i32 = arith.constant 0 : i32
    %c0_i32_0 = arith.constant 0 : i32
    %c0_i32_1 = arith.constant 0 : i32
    return %c0_i32, %c0_i32_0 : i32, i32
  }
  func.func @transform_6(%arg0: i32) -> (i32, i32) {
    %c0_i32 = arith.constant 0 : i32
    %c0_i32_0 = arith.constant 0 : i32
    %c0_i32_1 = arith.constant 0 : i32
    return %c0_i32, %c0_i32_0 : i32, i32
  }
  func.func @transform_7(%arg0: i32) -> (i32, i32) {
    %c0_i32 = arith.constant 0 : i32
    %c0_i32_0 = arith.constant 0 : i32
    return %arg0, %c0_i32 : i32, i32
  }
  func.func @transform_8(%arg0: i32) -> (i32, i32) {
    %c0_i32 = arith.constant 0 : i32
    %c0_i32_0 = arith.constant 0 : i32
    %c0_i32_1 = arith.constant 0 : i32
    return %c0_i32, %c0_i32_0 : i32, i32
  }
}

</mosaic_0001>

<llo_original>
// kernel: tpu_custom_call.1
$region0: #{tpu_custom_call.1}
  #allocation0 [shape = 'u32[]', space=smem, size = 0x4, offset = 0x4, fixed_abs, tag = 'smem constant byte address 0x4 - core index']
  #allocation1 [shape = 'u32[144,128]{1,0:T(1,128)}', space=vmem, size = 0x12000, scoped, tag = 'internal scratch']
  #allocation2 [shape = 'f32[1,128]{1,0:T(1,128)}', space=vmem, size = 0x200, scoped, tag = 'scratch operand']
  #allocation3 [shape = 'f32[1,128]{1,0:T(1,128)}', space=vmem, size = 0x200, scoped, tag = 'scratch operand']
  %s0 = inlined_call_operand.vmem [shape: f32[128,784], index: 0, kind: input, shape index: {}]
  %s1 = inlined_call_operand.vmem [shape: bf16[784,128], index: 1, kind: input, shape index: {}]
  %s2 = inlined_call_operand.vmem [shape: f32[1,128], index: 2, kind: input, shape index: {}]
  %s3 = inlined_call_operand.vmem [shape: bf16[128,128], index: 3, kind: input, shape index: {}]
  %s4 = inlined_call_operand.vmem [shape: f32[1,128], index: 4, kind: input, shape index: {}]
  %s5 = inlined_call_operand.vmem [shape: bf16[128,128], index: 5, kind: input, shape index: {}]
  %s6 = inlined_call_operand.vmem [shape: f32[1,128], index: 6, kind: input, shape index: {}]
  %s7 = inlined_call_operand.hbm [shape: f32[128,128], index: 7, kind: output, shape index: {0}]
  %s8 = inlined_call_operand.hbm [shape: f32[1,128], index: 8, kind: output, shape index: {1}]
  %9 = xla_tuple %s7, %s8
  %s10 = sld [smem:[#allocation0]]
  $region77: #{tpu_custom_call.1} parent=0
    _
  %s12 = ssub.s32 1, %s10
  %s13 = scalar_select 0, %s12, %s10
  $region1: #{tpu_custom_call.1} parent=0
    #allocation4 [shape = 'u8[32768]{0}', space=vmem, size = 0x8000, scoped, tag = 'output window, operand 0']
    #allocation5 [shape = 's32[2]{0}', space=sflag, size = 0x8, scoped, tag = 'scoped memory for tpu_custom_call.1']
    #allocation6 [shape = 'u8[512]{0}', space=vmem, size = 0x400, scoped, tag = 'output window, operand 1, single buffered']
    #allocation7 [shape = 's32[1]{0}', space=sflag, size = 0x4, scoped, tag = 'scoped memory for tpu_custom_call.1']
    %14 = vsyncpa [#allocation5], 0
    %s15 = scalar_lea.sflag [#allocation5], 1
    %16 = vsyncpa %s15, 0
    %17 = vsyncpa [#allocation7], 0
    loop: start=0, step=1, limit=6
    $region2: #{tpu_custom_call.1} parent=1 // loop_pre_header
      _
    $region3: #{tpu_custom_call.1} parent=1 // loop_header
      %s19 = sphi 0, %s23
      %p20 = scmp.ge.s32.totalorder %s19, 6
      %s29 = sphi 0, %s31
      %s32 = sphi 0, %s29
      %s33 = sphi 0, %s32
      %s49 = sphi 0, %s33
      %s53 = sphi 0, %s53
      %s55 = sphi 0, %s53
      %s56 = sphi 0, %s55
      %s70 = sphi 0, %s56
      %s74 = sphi 0, %s74
      %s76 = sphi 0, %s74
      %s77 = sphi 0, %s76
      %s91 = sphi 0, %s77
      %s95 = sphi 0, %s95
      %s97 = sphi 0, %s95
      %s98 = sphi 0, %s97
      %s112 = sphi 0, %s98
      %s116 = sphi 0, %s116
      %s118 = sphi 0, %s116
      %s119 = sphi 0, %s118
      %s133 = sphi 0, %s119
      %s137 = sphi 0, %s137
      %s139 = sphi 0, %s137
      %s140 = sphi 0, %s139
      %s154 = sphi 0, %s140
      %s158 = sphi 0, %s158
      %s160 = sphi 0, %s158
      %s161 = sphi 0, %s160
      %s175 = sphi 0, %s161
      %s181 = sphi 0, %s183
      %s184 = sphi 0, %s181
      %s185 = sphi 0, %s184
      %s201 = sphi 0, %s185
      %s205 = sphi 0, %s205
      %s207 = sphi 0, %s205
      %s208 = sphi 0, %s207
      %s222 = sphi 0, %s208
    $region4: #{tpu_custom_call.1} parent=1 // loop_header_branch
      %22 = sbr.rel (%p20) target = $region8
    $region5: #{tpu_custom_call.1} parent=1 // loop_body
      %s24 = ssub.s32 %s19, 1
      %s25 = ssub.s32 %s19, 2
      %s26 = sadd.s32 %s19, 1
      %s27 = ssub.s32 %s19, %s26
      %p28 = scmp.eq.s32.totalorder %s27, 0
      %s30 = sadd.s32 %s29, 1
      %s31 = scalar_select %p28, %s29, %s30
      %p34 = pneg %p28
      %p35 = scmp.eq.s32.totalorder %s19, 3
      %p36 = por %p34, %p35
      %p37 = scmp.ne.s32.totalorder %s29, %s32
      %p38 = scmp.eq.s32.totalorder %s19, 0
      %p39 = por %p37, %p38
      %p40 = scmp.ne.s32.totalorder %s29, %s32
      %p41 = scmp.eq.s32.totalorder %s24, 3
      %p42 = por %p40, %p41
      %p43 = scmp.ne.s32.totalorder %s32, %s33
      %p44 = scmp.eq.s32.totalorder %s24, 0
      %p45 = por %p43, %p44
      %p46 = scmp.ne.s32.totalorder %s32, %s33
      %p47 = scmp.eq.s32.totalorder %s25, 3
      %p48 = por %p46, %p47
      %p50 = scmp.ne.s32.totalorder %s33, %s49
      %p51 = scmp.eq.s32.totalorder %s25, 0
      %p52 = por %p50, %p51
      %s54 = sadd.s32 %s53, 1
      %p57 = scmp.eq.s32.totalorder %s19, 3
      %p58 = scmp.ne.s32.totalorder %s53, %s55
      %p59 = scmp.eq.s32.totalorder %s19, 0
      %p60 = por %p58, %p59
      %p61 = scmp.ne.s32.totalorder %s53, %s55
      %p62 = scmp.eq.s32.totalorder %s24, 3
      %p63 = por %p61, %p62
      %p64 = scmp.ne.s32.totalorder %s55, %s56
      %p65 = scmp.eq.s32.totalorder %s24, 0
      %p66 = por %p64, %p65
      %p67 = scmp.ne.s32.totalorder %s55, %s56
      %p68 = scmp.eq.s32.totalorder %s25, 3
      %p69 = por %p67, %p68
      %p71 = scmp.ne.s32.totalorder %s56, %s70
      %p72 = scmp.eq.s32.totalorder %s25, 0
      %p73 = por %p71, %p72
      %s75 = sadd.s32 %s74, 1
      %p78 = scmp.eq.s32.totalorder %s19, 3
      %p79 = scmp.ne.s32.totalorder %s74, %s76
      %p80 = scmp.eq.s32.totalorder %s19, 0
      %p81 = por %p79, %p80
      %p82 = scmp.ne.s32.totalorder %s74, %s76
      %p83 = scmp.eq.s32.totalorder %s24, 3
      %p84 = por %p82, %p83
      %p85 = scmp.ne.s32.totalorder %s76, %s77
      %p86 = scmp.eq.s32.totalorder %s24, 0
      %p87 = por %p85, %p86
      %p88 = scmp.ne.s32.totalorder %s76, %s77
      %p89 = scmp.eq.s32.totalorder %s25, 3
      %p90 = por %p88, %p89
      %p92 = scmp.ne.s32.totalorder %s77, %s91
      %p93 = scmp.eq.s32.totalorder %s25, 0
      %p94 = por %p92, %p93
      %s96 = sadd.s32 %s95, 1
      %p99 = scmp.eq.s32.totalorder %s19, 3
      %p100 = scmp.ne.s32.totalorder %s95, %s97
      %p101 = scmp.eq.s32.totalorder %s19, 0
      %p102 = por %p100, %p101
      %p103 = scmp.ne.s32.totalorder %s95, %s97
      %p104 = scmp.eq.s32.totalorder %s24, 3
      %p105 = por %p103, %p104
      %p106 = scmp.ne.s32.totalorder %s97, %s98
      %p107 = scmp.eq.s32.totalorder %s24, 0
      %p108 = por %p106, %p107
      %p109 = scmp.ne.s32.totalorder %s97, %s98
      %p110 = scmp.eq.s32.totalorder %s25, 3
      %p111 = por %p109, %p110
      %p113 = scmp.ne.s32.totalorder %s98, %s112
      %p114 = scmp.eq.s32.totalorder %s25, 0
      %p115 = por %p113, %p114
      %s117 = sadd.s32 %s116, 1
      %p120 = scmp.eq.s32.totalorder %s19, 3
      %p121 = scmp.ne.s32.totalorder %s116, %s118
      %p122 = scmp.eq.s32.totalorder %s19, 0
      %p123 = por %p121, %p122
      %p124 = scmp.ne.s32.totalorder %s116, %s118
      %p125 = scmp.eq.s32.totalorder %s24, 3
      %p126 = por %p124, %p125
      %p127 = scmp.ne.s32.totalorder %s118, %s119
      %p128 = scmp.eq.s32.totalorder %s24, 0
      %p129 = por %p127, %p128
      %p130 = scmp.ne.s32.totalorder %s118, %s119
      %p131 = scmp.eq.s32.totalorder %s25, 3
      %p132 = por %p130, %p131
      %p134 = scmp.ne.s32.totalorder %s119, %s133
      %p135 = scmp.eq.s32.totalorder %s25, 0
      %p136 = por %p134, %p135
      %s138 = sadd.s32 %s137, 1
      %p141 = scmp.eq.s32.totalorder %s19, 3
      %p142 = scmp.ne.s32.totalorder %s137, %s139
      %p143 = scmp.eq.s32.totalorder %s19, 0
      %p144 = por %p142, %p143
      %p145 = scmp.ne.s32.totalorder %s137, %s139
      %p146 = scmp.eq.s32.totalorder %s24, 3
      %p147 = por %p145, %p146
      %p148 = scmp.ne.s32.totalorder %s139, %s140
      %p149 = scmp.eq.s32.totalorder %s24, 0
      %p150 = por %p148, %p149
      %p151 = scmp.ne.s32.totalorder %s139, %s140
      %p152 = scmp.eq.s32.totalorder %s25, 3
      %p153 = por %p151, %p152
      %p155 = scmp.ne.s32.totalorder %s140, %s154
      %p156 = scmp.eq.s32.totalorder %s25, 0
      %p157 = por %p155, %p156
      %s159 = sadd.s32 %s158, 1
      %p162 = scmp.eq.s32.totalorder %s19, 3
      %p163 = scmp.ne.s32.totalorder %s158, %s160
      %p164 = scmp.eq.s32.totalorder %s19, 0
      %p165 = por %p163, %p164
      %p166 = scmp.ne.s32.totalorder %s158, %s160
      %p167 = scmp.eq.s32.totalorder %s24, 3
      %p168 = por %p166, %p167
      %p169 = scmp.ne.s32.totalorder %s160, %s161
      %p170 = scmp.eq.s32.totalorder %s24, 0
      %p171 = por %p169, %p170
      %p172 = scmp.ne.s32.totalorder %s160, %s161
      %p173 = scmp.eq.s32.totalorder %s25, 3
      %p174 = por %p172, %p173
      %p176 = scmp.ne.s32.totalorder %s161, %s175
      %p177 = scmp.eq.s32.totalorder %s25, 0
      %p178 = por %p176, %p177
      %s179 = ssub.s32 %s19, %s26
      %p180 = scmp.eq.s32.totalorder %s179, 0
      %s182 = sadd.s32 %s181, 1
      %s183 = scalar_select %p180, %s181, %s182
      %p186 = pneg %p180
      %p187 = scmp.eq.s32.totalorder %s19, 3
      %p188 = por %p186, %p187
      %p189 = scmp.ne.s32.totalorder %s181, %s184
      %p190 = scmp.eq.s32.totalorder %s19, 0
      %p191 = por %p189, %p190
      %p192 = scmp.ne.s32.totalorder %s181, %s184
      %p193 = scmp.eq.s32.totalorder %s24, 3
      %p194 = por %p192, %p193
      %p195 = scmp.ne.s32.totalorder %s184, %s185
      %p196 = scmp.eq.s32.totalorder %s24, 0
      %p197 = por %p195, %p196
      %p198 = scmp.ne.s32.totalorder %s184, %s185
      %p199 = scmp.eq.s32.totalorder %s25, 3
      %p200 = por %p198, %p199
      %p202 = scmp.ne.s32.totalorder %s185, %s201
      %p203 = scmp.eq.s32.totalorder %s25, 0
      %p204 = por %p202, %p203
      %s206 = sadd.s32 %s205, 1
      %p209 = scmp.eq.s32.totalorder %s19, 3
      %p210 = scmp.ne.s32.totalorder %s205, %s207
      %p211 = scmp.eq.s32.totalorder %s19, 0
      %p212 = por %p210, %p211
      %p213 = scmp.ne.s32.totalorder %s205, %s207
      %p214 = scmp.eq.s32.totalorder %s24, 3
      %p215 = por %p213, %p214
      %p216 = scmp.ne.s32.totalorder %s207, %s208
      %p217 = scmp.eq.s32.totalorder %s24, 0
      %p218 = por %p216, %p217
      %p219 = scmp.ne.s32.totalorder %s207, %s208
      %p220 = scmp.eq.s32.totalorder %s25, 3
      %p221 = por %p219, %p220
      %p223 = scmp.ne.s32.totalorder %s208, %s222
      %p224 = scmp.eq.s32.totalorder %s25, 0
      %p225 = por %p223, %p224
      %p226 = scmp.le.s32.totalorder 1, %s19
      %p227 = scmp.lt.s32.totalorder %s19, 5
      %p228 = pnand %p226, %p227
      %p229 = pneg %p228
      // Predicated region
      $region9: #{tpu_custom_call.1} parent=5 // pred_check
        _
      $region10: #{tpu_custom_call.1} parent=5 // pred_check_branch
        %231 = sbr.rel (%p228) target = $region12
      $region11: #{tpu_custom_call.1} parent=5 // pred_region
        %s232 = ssub.s32 %s19, 1
        // Predicated region
        $region13: #{tpu_custom_call.1} parent=11 // pred_check
          %p233 = pneg %p66
        $region14: #{tpu_custom_call.1} parent=11 // pred_check_branch
          %235 = sbr.rel (%p233) target = $region16
        $region15: #{tpu_custom_call.1} parent=11 // pred_region
          _
        $region16: #{tpu_custom_call.1} parent=11 // pred_fallthru
          _
        // Predicated region
        $region17: #{tpu_custom_call.1} parent=11 // pred_check
          %p236 = pneg %p87
        $region18: #{tpu_custom_call.1} parent=11 // pred_check_branch
          %238 = sbr.rel (%p236) target = $region20
        $region19: #{tpu_custom_call.1} parent=11 // pred_region
          _
        $region20: #{tpu_custom_call.1} parent=11 // pred_fallthru
          _
        // Predicated region
        $region21: #{tpu_custom_call.1} parent=11 // pred_check
          %p239 = pneg %p108
        $region22: #{tpu_custom_call.1} parent=11 // pred_check_branch
          %241 = sbr.rel (%p239) target = $region24
        $region23: #{tpu_custom_call.1} parent=11 // pred_region
          _
        $region24: #{tpu_custom_call.1} parent=11 // pred_fallthru
          _
        // Predicated region
        $region25: #{tpu_custom_call.1} parent=11 // pred_check
          %p242 = pneg %p129
        $region26: #{tpu_custom_call.1} parent=11 // pred_check_branch
          %244 = sbr.rel (%p242) target = $region28
        $region27: #{tpu_custom_call.1} parent=11 // pred_region
          _
        $region28: #{tpu_custom_call.1} parent=11 // pred_fallthru
          _
        // Predicated region
        $region29: #{tpu_custom_call.1} parent=11 // pred_check
          %p245 = pneg %p150
        $region30: #{tpu_custom_call.1} parent=11 // pred_check_branch
          %247 = sbr.rel (%p245) target = $region32
        $region31: #{tpu_custom_call.1} parent=11 // pred_region
          _
        $region32: #{tpu_custom_call.1} parent=11 // pred_fallthru
          _
        // Predicated region
        $region33: #{tpu_custom_call.1} parent=11 // pred_check
          %p248 = pneg %p171
        $region34: #{tpu_custom_call.1} parent=11 // pred_check_branch
          %250 = sbr.rel (%p248) target = $region36
        $region35: #{tpu_custom_call.1} parent=11 // pred_region
          _
        $region36: #{tpu_custom_call.1} parent=11 // pred_fallthru
          _
      $region12: #{tpu_custom_call.1} parent=5 // pred_fallthru
        _
      %p251 = scmp.lt.s32.totalorder %s19, 4
      // Predicated region
      $region37: #{tpu_custom_call.1} parent=5 // pred_check
        %p252 = pneg %p251
      $region38: #{tpu_custom_call.1} parent=5 // pred_check_branch
        %254 = sbr.rel (%p252) target = $region40
      $region39: #{tpu_custom_call.1} parent=5 // pred_region
        // Predicated region
        $region41: #{tpu_custom_call.1} parent=39 // pred_check
          %p255 = pneg %p39
        $region42: #{tpu_custom_call.1} parent=39 // pred_check_branch
          %257 = sbr.rel (%p255) target = $region44
        $region43: #{tpu_custom_call.1} parent=39 // pred_region
          %s258 = smul.u32 4, %s19
          %p259 = scmp.lt.s32.totalorder %s258, 15
          %s260 = scalar_select %p259, %s258, 15
          %s261 = smul.addr %s260, 7
          %s262 = smul.addr %s261, 8
          %s263 = scalar_lea.vmem %s0, %s262
          %s264 = smul.u32 4, %s19
        $region44: #{tpu_custom_call.1} parent=39 // pred_fallthru
          _
      $region40: #{tpu_custom_call.1} parent=5 // pred_fallthru
        _
      %p265 = scmp.le.s32.totalorder 1, %s19
      %p266 = scmp.lt.s32.totalorder %s19, 5
      %p267 = pnand %p265, %p266
      %p268 = pneg %p267
      // Predicated region
      $region45: #{tpu_custom_call.1} parent=5 // pred_check
        _
      $region46: #{tpu_custom_call.1} parent=5 // pred_check_branch
        %270 = sbr.rel (%p267) target = $region48
      $region47: #{tpu_custom_call.1} parent=5 // pred_region
        %s271 = ssub.s32 %s19, 1
        %s272 = smul.u32 4, %s24
        %p273 = scmp.lt.s32.totalorder %s272, 15
        %s274 = scalar_select %p273, %s272, 15
        %s275 = smul.addr %s274, 7
        %s276 = smul.addr %s275, 8
        %s277 = scalar_lea.vmem %s0, %s276
        %p278 = pneg %p45
        %p279 = pneg %p42
        %p280 = pneg %p66
        %p281 = pneg %p63
        %p282 = pneg %p87
        %p283 = pneg %p84
        %p284 = pneg %p108
        %p285 = pneg %p105
        %p286 = pneg %p129
        %p287 = pneg %p126
        %p288 = pneg %p150
        %p289 = pneg %p147
        %p290 = pneg %p171
        %p291 = pneg %p168
        %p292 = pneg %p197
        %p293 = pneg %p194
        %s294 = sand.u32 %s184, 1
        %s295 = scalar_lea.sflag [#allocation5], %s294
        %s296 = sand.u32 %s184, 1
        %s297 = smul.addr %s296, 32
        %s298 = scalar_lea.vmem [#allocation4], %s297
        %p299 = pneg %p218
        %p300 = pneg %p215
        %s301 = smul.u32 4, %s24
        %p302 = scmp.lt.s32.totalorder %s301, 15
        %s303 = scalar_select %p302, %s301, 15
        %s304 = smul.addr %s303, 7
        %s305 = smul.addr %s304, 8
        %s306 = scalar_lea.vmem %s0, %s305
        %s307 = smul.u32 4, %s24
        %s308 = smul.u32 4, %s24
        %p310 = scmp.eq.s32.totalorder %s24, 0
        // Predicated region
        $region49: #{tpu_custom_call.1} parent=47 // pred_check
          %p311 = pneg %p310
        $region50: #{tpu_custom_call.1} parent=47 // pred_check_branch
          %313 = sbr.rel (%p311) target = $region52
        $region51: #{tpu_custom_call.1} parent=47 // pred_region
          %314 = vst [vmem:[#allocation2] sm:$0x1] -inf
          %315 = vst [vmem:[#allocation3] sm:$0x1] 0.0
        $region52: #{tpu_custom_call.1} parent=47 // pred_fallthru
          _
        %v316 = vld [vmem:[%s306] sm:$0xff]
        %v317 = vld [vmem:[%s306 + $0x8] sm:$0xff]
        %v318 = vld [vmem:[%s306 + $0x10] sm:$0xff]
        %v319 = vld [vmem:[%s306 + $0x18] sm:$0xff]
        %v320 = vld [vmem:[%s306 + $0x20] sm:$0xff]
        %v321 = vld [vmem:[%s306 + $0x28] sm:$0xff]
        %v322 = vld [vmem:[%s306 + $0x30] sm:$0xff]
        %v323 = vld [vmem:[%s306 + $0x38] sm:$0xff]
        %v324 = vld [vmem:[%s306 + $0x40] sm:$0xff]
        %v325 = vld [vmem:[%s306 + $0x48] sm:$0xff]
        %v326 = vld [vmem:[%s306 + $0x50] sm:$0xff]
        %v327 = vld [vmem:[%s306 + $0x58] sm:$0xff]
        %v328 = vld [vmem:[%s306 + $0x60] sm:$0xff]
        %v329 = vld [vmem:[%s306 + $0x68] sm:$0xff]
        %v330 = vld [vmem:[%s306 + $0x70] sm:$0xff]
        %v331 = vld [vmem:[%s306 + $0x78] sm:$0xff]
        %v332 = vld [vmem:[%s306 + $0x80] sm:$0xff]
        %v333 = vld [vmem:[%s306 + $0x88] sm:$0xff]
        %v334 = vld [vmem:[%s306 + $0x90] sm:$0xff]
        %v335 = vld [vmem:[%s306 + $0x98] sm:$0xff]
        %v336 = vld [vmem:[%s306 + $0xa0] sm:$0xff]
        %v337 = vld [vmem:[%s306 + $0xa8] sm:$0xff]
        %v338 = vld [vmem:[%s306 + $0xb0] sm:$0xff]
        %v339 = vld [vmem:[%s306 + $0xb8] sm:$0xff]
        %v340 = vld [vmem:[%s306 + $0xc0] sm:$0xff]
        %v341 = vld [vmem:[%s306 + $0xc8] sm:$0xff]
        %v342 = vld [vmem:[%s306 + $0xd0] sm:$0xff]
        %v343 = vld [vmem:[%s306 + $0xd8] sm:$0xff]
        %v344 = vpack.c.bf16 %v323, %v316
        %v345 = vpack.c.bf16 %v324, %v317
        %v346 = vpack.c.bf16 %v325, %v318
        %v347 = vpack.c.bf16 %v326, %v319
        %v348 = vpack.c.bf16 %v327, %v320
        %v349 = vpack.c.bf16 %v328, %v321
        %v350 = vpack.c.bf16 %v329, %v322
        %v351 = vpack.c.bf16 %v337, %v330
        %v352 = vpack.c.bf16 %v338, %v331
        %v353 = vpack.c.bf16 %v339, %v332
        %v354 = vpack.c.bf16 %v340, %v333
        %v355 = vpack.c.bf16 %v341, %v334
        %v356 = vpack.c.bf16 %v342, %v335
        %v357 = vpack.c.bf16 %v343, %v336
        %v358 = vld [vmem:[%s1] sm:$0xf]
        %v359 = vld [vmem:[%s1 + $0x4] sm:$0xf]
        %v360 = vld [vmem:[%s1 + $0x8] sm:$0xf]
        %v361 = vld [vmem:[%s1 + $0xc] sm:$0xf]
        %v362 = vld [vmem:[%s1 + $0x10] sm:$0xf]
        %v363 = vld [vmem:[%s1 + $0x14] sm:$0xf]
        %v364 = vld [vmem:[%s1 + $0x18] sm:$0xf]
        %v365 = vld [vmem:[%s1 + $0x1c] sm:$0xf]
        %v366 = vld [vmem:[%s1 + $0x20] sm:$0xf]
        %v367 = vld [vmem:[%s1 + $0x24] sm:$0xf]
        %v368 = vld [vmem:[%s1 + $0x28] sm:$0xf]
        %v369 = vld [vmem:[%s1 + $0x2c] sm:$0xf]
        %v370 = vld [vmem:[%s1 + $0x30] sm:$0xf]
        %v371 = vld [vmem:[%s1 + $0x34] sm:$0xf]
        %v372 = vld [vmem:[%s1 + $0x38] sm:$0xf]
        %v373 = vld [vmem:[%s1 + $0x3c] sm:$0xf]
        %v374 = vld [vmem:[%s1 + $0x40] sm:$0xf]
        %v375 = vld [vmem:[%s1 + $0x44] sm:$0xf]
        %v376 = vld [vmem:[%s1 + $0x48] sm:$0xf]
        %v377 = vld [vmem:[%s1 + $0x4c] sm:$0xf]
        %v378 = vld [vmem:[%s1 + $0x50] sm:$0xf]
        %v379 = vld [vmem:[%s1 + $0x54] sm:$0xf]
        %v380 = vld [vmem:[%s1 + $0x58] sm:$0xf]
        %v381 = vld [vmem:[%s1 + $0x5c] sm:$0xf]
        %v382 = vld [vmem:[%s1 + $0x60] sm:$0xf]
        %v383 = vld [vmem:[%s1 + $0x64] sm:$0xf]
        %v384 = vld [vmem:[%s1 + $0x68] sm:$0xf]
        %v385 = vld [vmem:[%s1 + $0x6c] sm:$0xf]
        %v386 = vld [vmem:[%s1 + $0x70] sm:$0xf]
        %v387 = vld [vmem:[%s1 + $0x74] sm:$0xf]
        %v388 = vld [vmem:[%s1 + $0x78] sm:$0xf]
        %v389 = vld [vmem:[%s1 + $0x7c] sm:$0xf]
        %v390 = vld [vmem:[%s1 + $0x80] sm:$0xf]
        %v391 = vld [vmem:[%s1 + $0x84] sm:$0xf]
        %v392 = vld [vmem:[%s1 + $0x88] sm:$0xf]
        %v393 = vld [vmem:[%s1 + $0x8c] sm:$0xf]
        %v394 = vld [vmem:[%s1 + $0x90] sm:$0xf]
        %v395 = vld [vmem:[%s1 + $0x94] sm:$0xf]
        %v396 = vld [vmem:[%s1 + $0x98] sm:$0xf]
        %v397 = vld [vmem:[%s1 + $0x9c] sm:$0xf]
        %v398 = vld [vmem:[%s1 + $0xa0] sm:$0xf]
        %v399 = vld [vmem:[%s1 + $0xa4] sm:$0xf]
        %v400 = vld [vmem:[%s1 + $0xa8] sm:$0xf]
        %v401 = vld [vmem:[%s1 + $0xac] sm:$0xf]
        %v402 = vld [vmem:[%s1 + $0xb0] sm:$0xf]
        %v403 = vld [vmem:[%s1 + $0xb4] sm:$0xf]
        %v404 = vld [vmem:[%s1 + $0xb8] sm:$0xf]
        %v405 = vld [vmem:[%s1 + $0xbc] sm:$0xf]
        %v406 = vld [vmem:[%s1 + $0xc0] sm:$0xf]
        %v407 = vld [vmem:[%s1 + $0xc4] sm:$0xf]
        %v408 = vld [vmem:[%s1 + $0xc8] sm:$0xf]
        %v409 = vld [vmem:[%s1 + $0xcc] sm:$0xf]
        %v410 = vld [vmem:[%s1 + $0xd0] sm:$0xf]
        %v411 = vld [vmem:[%s1 + $0xd4] sm:$0xf]
        %v412 = vld [vmem:[%s1 + $0xd8] sm:$0xf]
        %v413 = vld [vmem:[%s1 + $0xdc] sm:$0xf]
        %v414 = vld [vmem:[%s1 + $0xe0] sm:$0xf]
        %v415 = vld [vmem:[%s1 + $0xe4] sm:$0xf]
        %v416 = vld [vmem:[%s1 + $0xe8] sm:$0xf]
        %v417 = vld [vmem:[%s1 + $0xec] sm:$0xf]
        %v418 = vld [vmem:[%s1 + $0xf0] sm:$0xf]
        %v419 = vld [vmem:[%s1 + $0xf4] sm:$0xf]
        %v420 = vld [vmem:[%s1 + $0xf8] sm:$0xf]
        %v421 = vld [vmem:[%s1 + $0xfc] sm:$0xf]
        %v422 = vld [vmem:[%s1 + $0x100] sm:$0xf]
        %v423 = vld [vmem:[%s1 + $0x104] sm:$0xf]
        %v424 = vld [vmem:[%s1 + $0x108] sm:$0xf]
        %v425 = vld [vmem:[%s1 + $0x10c] sm:$0xf]
        %v426 = vld [vmem:[%s1 + $0x110] sm:$0xf]
        %v427 = vld [vmem:[%s1 + $0x114] sm:$0xf]
        %v428 = vld [vmem:[%s1 + $0x118] sm:$0xf]
        %v429 = vld [vmem:[%s1 + $0x11c] sm:$0xf]
        %v430 = vld [vmem:[%s1 + $0x120] sm:$0xf]
        %v431 = vld [vmem:[%s1 + $0x124] sm:$0xf]
        %v432 = vld [vmem:[%s1 + $0x128] sm:$0xf]
        %v433 = vld [vmem:[%s1 + $0x12c] sm:$0xf]
        %v434 = vld [vmem:[%s1 + $0x130] sm:$0xf]
        %v435 = vld [vmem:[%s1 + $0x134] sm:$0xf]
        %v436 = vld [vmem:[%s1 + $0x138] sm:$0xf]
        %v437 = vld [vmem:[%s1 + $0x13c] sm:$0xf]
        %v438 = vld [vmem:[%s1 + $0x140] sm:$0xf]
        %v439 = vld [vmem:[%s1 + $0x144] sm:$0xf]
        %v440 = vld [vmem:[%s1 + $0x148] sm:$0xf]
        %v441 = vld [vmem:[%s1 + $0x14c] sm:$0xf]
        %v442 = vld [vmem:[%s1 + $0x150] sm:$0xf]
        %v443 = vld [vmem:[%s1 + $0x154] sm:$0xf]
        %v444 = vld [vmem:[%s1 + $0x158] sm:$0xf]
        %v445 = vld [vmem:[%s1 + $0x15c] sm:$0xf]
        %v446 = vld [vmem:[%s1 + $0x160] sm:$0xf]
        %v447 = vld [vmem:[%s1 + $0x164] sm:$0xf]
        %v448 = vld [vmem:[%s1 + $0x168] sm:$0xf]
        %v449 = vld [vmem:[%s1 + $0x16c] sm:$0xf]
        %v450 = vld [vmem:[%s1 + $0x170] sm:$0xf]
        %v451 = vld [vmem:[%s1 + $0x174] sm:$0xf]
        %v452 = vld [vmem:[%s1 + $0x178] sm:$0xf]
        %v453 = vld [vmem:[%s1 + $0x17c] sm:$0xf]
        %v454 = vld [vmem:[%s1 + $0x180] sm:$0xf]
        %v455 = vld [vmem:[%s1 + $0x184] sm:$0xf]
        %v456 = vld [vmem:[%s2] sm:$0x1]
        %v458 = vlaneseq
        %v459 = vshrl.u32 %v458, 7
        %v460 = vsub.s32 0, %v459
        %v461 = vrot.slane %v456, %v460
        %v561 = vunpack.c.l.b16 %v358
        %v562 = vunpack.c.l.b16 %v359
        %v563 = vunpack.c.l.b16 %v360
        %v564 = vunpack.c.l.b16 %v361
        %v565 = vunpack.c.l.b16 %v362
        %v566 = vunpack.c.l.b16 %v363
        %v567 = vunpack.c.l.b16 %v364
        %v568 = vunpack.c.l.b16 %v365
        %v569 = vunpack.c.l.b16 %v366
        %v570 = vunpack.c.l.b16 %v367
        %v571 = vunpack.c.l.b16 %v368
        %v572 = vunpack.c.l.b16 %v369
        %v573 = vunpack.c.l.b16 %v370
        %v574 = vunpack.c.l.b16 %v371
        %v575 = vunpack.c.l.b16 %v372
        %v576 = vunpack.c.l.b16 %v373
        %v577 = vunpack.c.l.b16 %v374
        %v578 = vunpack.c.l.b16 %v375
        %v579 = vunpack.c.l.b16 %v376
        %v580 = vunpack.c.l.b16 %v377
        %v581 = vunpack.c.l.b16 %v378
        %v582 = vunpack.c.l.b16 %v379
        %v583 = vunpack.c.l.b16 %v380
        %v584 = vunpack.c.l.b16 %v381
        %v585 = vunpack.c.l.b16 %v382
        %v586 = vunpack.c.l.b16 %v383
        %v587 = vunpack.c.l.b16 %v384
        %v588 = vunpack.c.l.b16 %v385
        %v589 = vunpack.c.l.b16 %v386
        %v590 = vunpack.c.l.b16 %v387
        %v591 = vunpack.c.l.b16 %v388
        %v592 = vunpack.c.l.b16 %v389
        %v593 = vunpack.c.l.b16 %v390
        %v594 = vunpack.c.l.b16 %v391
        %v595 = vunpack.c.l.b16 %v392
        %v596 = vunpack.c.l.b16 %v393
        %v597 = vunpack.c.l.b16 %v394
        %v598 = vunpack.c.l.b16 %v395
        %v599 = vunpack.c.l.b16 %v396
        %v600 = vunpack.c.l.b16 %v397
        %v601 = vunpack.c.l.b16 %v398
        %v602 = vunpack.c.l.b16 %v399
        %v603 = vunpack.c.l.b16 %v400
        %v604 = vunpack.c.l.b16 %v401
        %v605 = vunpack.c.l.b16 %v402
        %v606 = vunpack.c.l.b16 %v403
        %v607 = vunpack.c.l.b16 %v404
        %v608 = vunpack.c.l.b16 %v405
        %v609 = vunpack.c.l.b16 %v406
        %v610 = vunpack.c.l.b16 %v407
        %v611 = vunpack.c.l.b16 %v408
        %v612 = vunpack.c.l.b16 %v409
        %v613 = vunpack.c.l.b16 %v410
        %v614 = vunpack.c.l.b16 %v411
        %v615 = vunpack.c.l.b16 %v412
        %v616 = vunpack.c.l.b16 %v413
        %v617 = vunpack.c.l.b16 %v414
        %v618 = vunpack.c.l.b16 %v415
        %v619 = vunpack.c.l.b16 %v416
        %v620 = vunpack.c.l.b16 %v417
        %v621 = vunpack.c.l.b16 %v418
        %v622 = vunpack.c.l.b16 %v419
        %v623 = vunpack.c.l.b16 %v420
        %v624 = vunpack.c.l.b16 %v421
        %v625 = vunpack.c.l.b16 %v422
        %v626 = vunpack.c.l.b16 %v423
        %v627 = vunpack.c.l.b16 %v424
        %v628 = vunpack.c.l.b16 %v425
        %v629 = vunpack.c.l.b16 %v426
        %v630 = vunpack.c.l.b16 %v427
        %v631 = vunpack.c.l.b16 %v428
        %v632 = vunpack.c.l.b16 %v429
        %v633 = vunpack.c.l.b16 %v430
        %v634 = vunpack.c.l.b16 %v431
        %v635 = vunpack.c.l.b16 %v432
        %v636 = vunpack.c.l.b16 %v433
        %v637 = vunpack.c.l.b16 %v434
        %v638 = vunpack.c.l.b16 %v435
        %v639 = vunpack.c.l.b16 %v436
        %v640 = vunpack.c.l.b16 %v437
        %v641 = vunpack.c.l.b16 %v438
        %v642 = vunpack.c.l.b16 %v439
        %v643 = vunpack.c.l.b16 %v440
        %v644 = vunpack.c.l.b16 %v441
        %v645 = vunpack.c.l.b16 %v442
        %v646 = vunpack.c.l.b16 %v443
        %v647 = vunpack.c.l.b16 %v444
        %v648 = vunpack.c.l.b16 %v445
        %v649 = vunpack.c.l.b16 %v446
        %v650 = vunpack.c.l.b16 %v447
        %v651 = vunpack.c.l.b16 %v448
        %v652 = vunpack.c.l.b16 %v449
        %v653 = vunpack.c.l.b16 %v450
        %v654 = vunpack.c.l.b16 %v451
        %v655 = vunpack.c.l.b16 %v452
        %v656 = vunpack.c.l.b16 %v453
        %v657 = vunpack.c.l.b16 %v454
        %v658 = vunpack.c.l.b16 %v455
        %v659 = vpack.c.b16 %v562, %v561
        %v660 = vpack.c.b16 %v564, %v563
        %v661 = vpack.c.b16 %v566, %v565
        %v662 = vpack.c.b16 %v568, %v567
        %v663 = vpack.c.b16 %v570, %v569
        %v664 = vpack.c.b16 %v572, %v571
        %v665 = vpack.c.b16 %v574, %v573
        %v666 = vpack.c.b16 %v576, %v575
        %v667 = vpack.c.b16 %v578, %v577
        %v668 = vpack.c.b16 %v580, %v579
        %v669 = vpack.c.b16 %v582, %v581
        %v670 = vpack.c.b16 %v584, %v583
        %v671 = vpack.c.b16 %v586, %v585
        %v672 = vpack.c.b16 %v588, %v587
        %v673 = vpack.c.b16 %v590, %v589
        %v674 = vpack.c.b16 %v592, %v591
        %v675 = vpack.c.b16 %v594, %v593
        %v676 = vpack.c.b16 %v596, %v595
        %v677 = vpack.c.b16 %v598, %v597
        %v678 = vpack.c.b16 %v600, %v599
        %v679 = vpack.c.b16 %v602, %v601
        %v680 = vpack.c.b16 %v604, %v603
        %v681 = vpack.c.b16 %v606, %v605
        %v682 = vpack.c.b16 %v608, %v607
        %v683 = vpack.c.b16 %v610, %v609
        %v684 = vpack.c.b16 %v612, %v611
        %v685 = vpack.c.b16 %v614, %v613
        %v686 = vpack.c.b16 %v616, %v615
        %v687 = vpack.c.b16 %v618, %v617
        %v688 = vpack.c.b16 %v620, %v619
        %v689 = vpack.c.b16 %v622, %v621
        %v690 = vpack.c.b16 %v624, %v623
        %v691 = vpack.c.b16 %v626, %v625
        %v692 = vpack.c.b16 %v628, %v627
        %v693 = vpack.c.b16 %v630, %v629
        %v694 = vpack.c.b16 %v632, %v631
        %v695 = vpack.c.b16 %v634, %v633
        %v696 = vpack.c.b16 %v636, %v635
        %v697 = vpack.c.b16 %v638, %v637
        %v698 = vpack.c.b16 %v640, %v639
        %v699 = vpack.c.b16 %v642, %v641
        %v700 = vpack.c.b16 %v644, %v643
        %v701 = vpack.c.b16 %v646, %v645
        %v702 = vpack.c.b16 %v648, %v647
        %v703 = vpack.c.b16 %v650, %v649
        %v704 = vpack.c.b16 %v652, %v651
        %v705 = vpack.c.b16 %v654, %v653
        %v706 = vpack.c.b16 %v656, %v655
        %v707 = vpack.c.b16 %v658, %v657
        %vm757 = vcmask 130048
        %v759 = vsel %vm757, %v350, 0
        %v762 = vsel %vm757, %v357, 0
        %764 = vmatprep.subr.bf16.mxu0 0
        %765 = vmatpush1.bf16.msra.mxu0 %v666
        %766 = vmatprep.subr.bf16.mxu0 0
        %767 = vmatpush1.bf16.msra.mxu0 %v665
        %768 = vmatprep.subr.bf16.mxu0 0
        %769 = vmatpush1.bf16.msra.mxu0 %v664
        %770 = vmatprep.subr.bf16.mxu0 0
        %771 = vmatpush1.bf16.msra.mxu0 %v663
        %772 = vmatprep.subr.bf16.mxu0 0
        %773 = vmatpush1.bf16.msra.mxu0 %v662
        %774 = vmatprep.subr.bf16.mxu0 0
        %775 = vmatpush1.bf16.msra.mxu0 %v661
        %776 = vmatprep.subr.bf16.mxu0 0
        %777 = vmatpush1.bf16.msra.mxu0 %v660
        %778 = vmatprep.subr.bf16.mxu0 0
        %779 = vmatpush1.bf16.msra.mxu0 %v659
        %780 = vmatprep.subr.bf16.mxu0 0
        %781 = vmatpush2.bf16.msra.mxu0 %v674
        %782 = vmatprep.subr.bf16.mxu0 0
        %783 = vmatpush2.bf16.msra.mxu0 %v673
        %784 = vmatprep.subr.bf16.mxu0 0
        %785 = vmatpush2.bf16.msra.mxu0 %v672
        %786 = vmatprep.subr.bf16.mxu0 0
        %787 = vmatpush2.bf16.msra.mxu0 %v671
        %788 = vmatprep.subr.bf16.mxu0 0
        %789 = vmatpush2.bf16.msra.mxu0 %v670
        %790 = vmatprep.subr.bf16.mxu0 0
        %791 = vmatpush2.bf16.msra.mxu0 %v669
        %792 = vmatprep.subr.bf16.mxu0 0
        %793 = vmatpush2.bf16.msra.mxu0 %v668
        %794 = vmatprep.subr.bf16.mxu0 0
        %795 = vmatpush2.bf16.msra.mxu0 %v667
        %796 = vmatprep.mubr.bf16.mxu0 %v345
        %797 = vmatmul.mubr.bf16.gmra.mxu0 %v344
        %v798 = vpop.f32.mrf.mxu0
        %v799 = vadd.f32 %v461, %v798
        %v800 = vpop.f32.mrf.mxu0
        %v801 = vpop.f32.mrf.mxu0
        %v802 = vadd.f32 %v461, %v801
        %v803 = vpop.f32.mrf.mxu0
        %804 = vmatprep.mubr.bf16.mxu0 %v352
        %805 = vmatmul.mubr.bf16.gmra.mxu0 %v351
        %v806 = vpop.f32.mrf.mxu0
        %v807 = vadd.f32 %v461, %v806
        %v808 = vpop.f32.mrf.mxu0
        %v809 = vpop.f32.mrf.mxu0
        %v810 = vadd.f32 %v461, %v809
        %v811 = vpop.f32.mrf.mxu0
        %812 = vdwg.mxu0
        %813 = vmatprep.subr.bf16.mxu0 0
        %814 = vmatpush1.bf16.msra.mxu0 %v682
        %815 = vmatprep.subr.bf16.mxu0 0
        %816 = vmatpush1.bf16.msra.mxu0 %v681
        %817 = vmatprep.subr.bf16.mxu0 0
        %818 = vmatpush1.bf16.msra.mxu0 %v680
        %819 = vmatprep.subr.bf16.mxu0 0
        %820 = vmatpush1.bf16.msra.mxu0 %v679
        %821 = vmatprep.subr.bf16.mxu0 0
        %822 = vmatpush1.bf16.msra.mxu0 %v678
        %823 = vmatprep.subr.bf16.mxu0 0
        %824 = vmatpush1.bf16.msra.mxu0 %v677
        %825 = vmatprep.subr.bf16.mxu0 0
        %826 = vmatpush1.bf16.msra.mxu0 %v676
        %827 = vmatprep.subr.bf16.mxu0 0
        %828 = vmatpush1.bf16.msra.mxu0 %v675
        %829 = vmatprep.subr.bf16.mxu0 0
        %830 = vmatpush2.bf16.msra.mxu0 %v690
        %831 = vmatprep.subr.bf16.mxu0 0
        %832 = vmatpush2.bf16.msra.mxu0 %v689
        %833 = vmatprep.subr.bf16.mxu0 0
        %834 = vmatpush2.bf16.msra.mxu0 %v688
        %835 = vmatprep.subr.bf16.mxu0 0
        %836 = vmatpush2.bf16.msra.mxu0 %v687
        %837 = vmatprep.subr.bf16.mxu0 0
        %838 = vmatpush2.bf16.msra.mxu0 %v686
        %839 = vmatprep.subr.bf16.mxu0 0
        %840 = vmatpush2.bf16.msra.mxu0 %v685
        %841 = vmatprep.subr.bf16.mxu0 0
        %842 = vmatpush2.bf16.msra.mxu0 %v684
        %843 = vmatprep.subr.bf16.mxu0 0
        %844 = vmatpush2.bf16.msra.mxu0 %v683
        %845 = vmatprep.mubr.bf16.mxu0 %v347
        %846 = vmatmul.mubr.bf16.gmra.mxu0 %v346
        %v847 = vpop.f32.mrf.mxu0
        %v848 = vadd.f32 %v799, %v847
        %v849 = vpop.f32.mrf.mxu0
        %v850 = vpop.f32.mrf.mxu0
        %v851 = vadd.f32 %v802, %v850
        %v852 = vpop.f32.mrf.mxu0
        %853 = vmatprep.mubr.bf16.mxu0 %v354
        %854 = vmatmul.mubr.bf16.gmra.mxu0 %v353
        %v855 = vpop.f32.mrf.mxu0
        %v856 = vadd.f32 %v807, %v855
        %v857 = vpop.f32.mrf.mxu0
        %v858 = vpop.f32.mrf.mxu0
        %v859 = vadd.f32 %v810, %v858
        %v860 = vpop.f32.mrf.mxu0
        %861 = vdwg.mxu0
        %862 = vmatprep.subr.bf16.mxu0 0
        %863 = vmatpush1.bf16.msra.mxu0 %v698
        %864 = vmatprep.subr.bf16.mxu0 0
        %865 = vmatpush1.bf16.msra.mxu0 %v697
        %866 = vmatprep.subr.bf16.mxu0 0
        %867 = vmatpush1.bf16.msra.mxu0 %v696
        %868 = vmatprep.subr.bf16.mxu0 0
        %869 = vmatpush1.bf16.msra.mxu0 %v695
        %870 = vmatprep.subr.bf16.mxu0 0
        %871 = vmatpush1.bf16.msra.mxu0 %v694
        %872 = vmatprep.subr.bf16.mxu0 0
        %873 = vmatpush1.bf16.msra.mxu0 %v693
        %874 = vmatprep.subr.bf16.mxu0 0
        %875 = vmatpush1.bf16.msra.mxu0 %v692
        %876 = vmatprep.subr.bf16.mxu0 0
        %877 = vmatpush1.bf16.msra.mxu0 %v691
        %878 = vmatprep.subr.bf16.mxu0 0
        %879 = vmatpush2.bf16.msra.mxu0 %v706
        %880 = vmatprep.subr.bf16.mxu0 0
        %881 = vmatpush2.bf16.msra.mxu0 %v705
        %882 = vmatprep.subr.bf16.mxu0 0
        %883 = vmatpush2.bf16.msra.mxu0 %v704
        %884 = vmatprep.subr.bf16.mxu0 0
        %885 = vmatpush2.bf16.msra.mxu0 %v703
        %886 = vmatprep.subr.bf16.mxu0 0
        %887 = vmatpush2.bf16.msra.mxu0 %v702
        %888 = vmatprep.subr.bf16.mxu0 0
        %889 = vmatpush2.bf16.msra.mxu0 %v701
        %890 = vmatprep.subr.bf16.mxu0 0
        %891 = vmatpush2.bf16.msra.mxu0 %v700
        %892 = vmatprep.subr.bf16.mxu0 0
        %893 = vmatpush2.bf16.msra.mxu0 %v699
        %894 = vmatprep.mubr.bf16.mxu0 %v349
        %895 = vmatmul.mubr.bf16.gmra.mxu0 %v348
        %v896 = vpop.f32.mrf.mxu0
        %v897 = vadd.f32 %v848, %v896
        %v898 = vpop.f32.mrf.mxu0
        %v899 = vpop.f32.mrf.mxu0
        %v900 = vadd.f32 %v851, %v899
        %v901 = vpop.f32.mrf.mxu0
        %902 = vmatprep.mubr.bf16.mxu0 %v356
        %903 = vmatmul.mubr.bf16.gmra.mxu0 %v355
        %v904 = vpop.f32.mrf.mxu0
        %v905 = vadd.f32 %v856, %v904
        %v906 = vpop.f32.mrf.mxu0
        %v907 = vpop.f32.mrf.mxu0
        %v908 = vadd.f32 %v859, %v907
        %v909 = vpop.f32.mrf.mxu0
        %910 = vdwg.mxu0
        %911 = vmatprep.subr.bf16.mxu0 0
        %912 = vmatpush1.bf16.msra.mxu0 0
        %913 = vmatprep.subr.bf16.mxu0 0
        %914 = vmatpush1.bf16.msra.mxu0 0
        %915 = vmatprep.subr.bf16.mxu0 0
        %916 = vmatpush1.bf16.msra.mxu0 0
        %917 = vmatprep.subr.bf16.mxu0 0
        %918 = vmatpush1.bf16.msra.mxu0 0
        %919 = vmatprep.subr.bf16.mxu0 0
        %920 = vmatpush1.bf16.msra.mxu0 0
        %921 = vmatprep.subr.bf16.mxu0 0
        %922 = vmatpush1.bf16.msra.mxu0 0
        %923 = vmatprep.subr.bf16.mxu0 0
        %924 = vmatpush1.bf16.msra.mxu0 0
        %925 = vmatprep.subr.bf16.mxu0 0
        %926 = vmatpush1.bf16.msra.mxu0 %v707
        %927 = vmatprep.subr.bf16.mxu0 0
        %928 = vmatpush2.bf16.msra.mxu0 0
        %929 = vmatprep.subr.bf16.mxu0 0
        %930 = vmatpush2.bf16.msra.mxu0 0
        %931 = vmatprep.subr.bf16.mxu0 0
        %932 = vmatpush2.bf16.msra.mxu0 0
        %933 = vmatprep.subr.bf16.mxu0 0
        %934 = vmatpush2.bf16.msra.mxu0 0
        %935 = vmatprep.subr.bf16.mxu0 0
        %936 = vmatpush2.bf16.msra.mxu0 0
        %937 = vmatprep.subr.bf16.mxu0 0
        %938 = vmatpush2.bf16.msra.mxu0 0
        %939 = vmatprep.subr.bf16.mxu0 0
        %940 = vmatpush2.bf16.msra.mxu0 0
        %941 = vmatprep.subr.bf16.mxu0 0
        %942 = vmatpush2.bf16.msra.mxu0 0
        %943 = vmatprep.mubr.bf16.mxu0 0
        %944 = vmatmul.mubr.bf16.gmra.mxu0 %v759
        %v945 = vpop.f32.mrf.mxu0
        %v946 = vadd.f32 %v897, %v945
        %v947 = vpop.f32.mrf.mxu0
        %v948 = vpop.f32.mrf.mxu0
        %v949 = vadd.f32 %v900, %v948
        %v950 = vpop.f32.mrf.mxu0
        %951 = vmatprep.mubr.bf16.mxu0 0
        %952 = vmatmul.mubr.bf16.gmra.mxu0 %v762
        %v953 = vpop.f32.mrf.mxu0
        %v954 = vadd.f32 %v905, %v953
        %v955 = vpop.f32.mrf.mxu0
        %v956 = vpop.f32.mrf.mxu0
        %v957 = vadd.f32 %v908, %v956
        %v958 = vpop.f32.mrf.mxu0
        %959 = vdwg.mxu0
        %v960 = vmax.f32 %v946, 0.0
        %v961 = vmax.f32 %v949, 0.0
        %v962 = vmax.f32 %v954, 0.0
        %v963 = vmax.f32 %v957, 0.0
        %v964 = vpack.c.bf16 %v961, %v960
        %v965 = vpack.c.bf16 %v963, %v962
        %v966 = vld [vmem:[%s3] sm:$0xf]
        %v967 = vld [vmem:[%s3 + $0x4] sm:$0xf]
        %v968 = vld [vmem:[%s3 + $0x8] sm:$0xf]
        %v969 = vld [vmem:[%s3 + $0xc] sm:$0xf]
        %v970 = vld [vmem:[%s3 + $0x10] sm:$0xf]
        %v971 = vld [vmem:[%s3 + $0x14] sm:$0xf]
        %v972 = vld [vmem:[%s3 + $0x18] sm:$0xf]
        %v973 = vld [vmem:[%s3 + $0x1c] sm:$0xf]
        %v974 = vld [vmem:[%s3 + $0x20] sm:$0xf]
        %v975 = vld [vmem:[%s3 + $0x24] sm:$0xf]
        %v976 = vld [vmem:[%s3 + $0x28] sm:$0xf]
        %v977 = vld [vmem:[%s3 + $0x2c] sm:$0xf]
        %v978 = vld [vmem:[%s3 + $0x30] sm:$0xf]
        %v979 = vld [vmem:[%s3 + $0x34] sm:$0xf]
        %v980 = vld [vmem:[%s3 + $0x38] sm:$0xf]
        %v981 = vld [vmem:[%s3 + $0x3c] sm:$0xf]
        %v982 = vld [vmem:[%s4] sm:$0x1]
        %v984 = vlaneseq
        %v985 = vshrl.u32 %v984, 7
        %v986 = vsub.s32 0, %v985
        %v987 = vrot.slane %v982, %v986
        %v1005 = vunpack.c.l.b16 %v966
        %v1006 = vunpack.c.l.b16 %v967
        %v1007 = vunpack.c.l.b16 %v968
        %v1008 = vunpack.c.l.b16 %v969
        %v1009 = vunpack.c.l.b16 %v970
        %v1010 = vunpack.c.l.b16 %v971
        %v1011 = vunpack.c.l.b16 %v972
        %v1012 = vunpack.c.l.b16 %v973
        %v1013 = vunpack.c.l.b16 %v974
        %v1014 = vunpack.c.l.b16 %v975
        %v1015 = vunpack.c.l.b16 %v976
        %v1016 = vunpack.c.l.b16 %v977
        %v1017 = vunpack.c.l.b16 %v978
        %v1018 = vunpack.c.l.b16 %v979
        %v1019 = vunpack.c.l.b16 %v980
        %v1020 = vunpack.c.l.b16 %v981
        %v1021 = vpack.c.b16 %v1006, %v1005
        %v1022 = vpack.c.b16 %v1008, %v1007
        %v1023 = vpack.c.b16 %v1010, %v1009
        %v1024 = vpack.c.b16 %v1012, %v1011
        %v1025 = vpack.c.b16 %v1014, %v1013
        %v1026 = vpack.c.b16 %v1016, %v1015
        %v1027 = vpack.c.b16 %v1018, %v1017
        %v1028 = vpack.c.b16 %v1020, %v1019
        %1037 = vmatprep.subr.bf16.mxu0 0
        %1038 = vmatpush1.bf16.msra.mxu0 %v1028
        %1039 = vmatprep.subr.bf16.mxu0 0
        %1040 = vmatpush1.bf16.msra.mxu0 %v1027
        %1041 = vmatprep.subr.bf16.mxu0 0
        %1042 = vmatpush1.bf16.msra.mxu0 %v1026
        %1043 = vmatprep.subr.bf16.mxu0 0
        %1044 = vmatpush1.bf16.msra.mxu0 %v1025
        %1045 = vmatprep.subr.bf16.mxu0 0
        %1046 = vmatpush1.bf16.msra.mxu0 %v1024
        %1047 = vmatprep.subr.bf16.mxu0 0
        %1048 = vmatpush1.bf16.msra.mxu0 %v1023
        %1049 = vmatprep.subr.bf16.mxu0 0
        %1050 = vmatpush1.bf16.msra.mxu0 %v1022
        %1051 = vmatprep.subr.bf16.mxu0 0
        %1052 = vmatpush1.bf16.msra.mxu0 %v1021
        %1053 = vmatprep.subr.bf16.mxu0 0
        %1054 = vmatpush2.bf16.msra.mxu0 0
        %1055 = vmatprep.subr.bf16.mxu0 0
        %1056 = vmatpush2.bf16.msra.mxu0 0
        %1057 = vmatprep.subr.bf16.mxu0 0
        %1058 = vmatpush2.bf16.msra.mxu0 0
        %1059 = vmatprep.subr.bf16.mxu0 0
        %1060 = vmatpush2.bf16.msra.mxu0 0
        %1061 = vmatprep.subr.bf16.mxu0 0
        %1062 = vmatpush2.bf16.msra.mxu0 0
        %1063 = vmatprep.subr.bf16.mxu0 0
        %1064 = vmatpush2.bf16.msra.mxu0 0
        %1065 = vmatprep.subr.bf16.mxu0 0
        %1066 = vmatpush2.bf16.msra.mxu0 0
        %1067 = vmatprep.subr.bf16.mxu0 0
        %1068 = vmatpush2.bf16.msra.mxu0 0
        %1069 = vmatprep.mubr.bf16.mxu0 0
        %1070 = vmatmul.mubr.bf16.gmra.mxu0 %v964
        %v1071 = vpop.f32.mrf.mxu0
        %v1072 = vadd.f32 %v987, %v1071
        %v1073 = vpop.f32.mrf.mxu0
        %v1074 = vpop.f32.mrf.mxu0
        %v1075 = vadd.f32 %v987, %v1074
        %v1076 = vpop.f32.mrf.mxu0
        %1077 = vmatprep.mubr.bf16.mxu0 0
        %1078 = vmatmul.mubr.bf16.gmra.mxu0 %v965
        %v1079 = vpop.f32.mrf.mxu0
        %v1080 = vadd.f32 %v987, %v1079
        %v1081 = vpop.f32.mrf.mxu0
        %v1082 = vpop.f32.mrf.mxu0
        %v1083 = vadd.f32 %v987, %v1082
        %v1084 = vpop.f32.mrf.mxu0
        %1085 = vdwg.mxu0
        %v1086 = vmax.f32 %v1072, 0.0
        %v1087 = vmax.f32 %v1075, 0.0
        %v1088 = vmax.f32 %v1080, 0.0
        %v1089 = vmax.f32 %v1083, 0.0
        %v1090 = vpack.c.bf16 %v1087, %v1086
        %v1091 = vpack.c.bf16 %v1089, %v1088
        %v1092 = vld [vmem:[%s5] sm:$0xf]
        %v1093 = vld [vmem:[%s5 + $0x4] sm:$0xf]
        %v1094 = vld [vmem:[%s5 + $0x8] sm:$0xf]
        %v1095 = vld [vmem:[%s5 + $0xc] sm:$0xf]
        %v1096 = vld [vmem:[%s5 + $0x10] sm:$0xf]
        %v1097 = vld [vmem:[%s5 + $0x14] sm:$0xf]
        %v1098 = vld [vmem:[%s5 + $0x18] sm:$0xf]
        %v1099 = vld [vmem:[%s5 + $0x1c] sm:$0xf]
        %v1100 = vld [vmem:[%s5 + $0x20] sm:$0xf]
        %v1101 = vld [vmem:[%s5 + $0x24] sm:$0xf]
        %v1102 = vld [vmem:[%s5 + $0x28] sm:$0xf]
        %v1103 = vld [vmem:[%s5 + $0x2c] sm:$0xf]
        %v1104 = vld [vmem:[%s5 + $0x30] sm:$0xf]
        %v1105 = vld [vmem:[%s5 + $0x34] sm:$0xf]
        %v1106 = vld [vmem:[%s5 + $0x38] sm:$0xf]
        %v1107 = vld [vmem:[%s5 + $0x3c] sm:$0xf]
        %v1108 = vld [vmem:[%s6] sm:$0x1]
        %v1110 = vlaneseq
        %v1111 = vshrl.u32 %v1110, 7
        %v1112 = vsub.s32 0, %v1111
        %v1113 = vrot.slane %v1108, %v1112
        %v1131 = vunpack.c.l.b16 %v1092
        %v1132 = vunpack.c.l.b16 %v1093
        %v1133 = vunpack.c.l.b16 %v1094
        %v1134 = vunpack.c.l.b16 %v1095
        %v1135 = vunpack.c.l.b16 %v1096
        %v1136 = vunpack.c.l.b16 %v1097
        %v1137 = vunpack.c.l.b16 %v1098
        %v1138 = vunpack.c.l.b16 %v1099
        %v1139 = vunpack.c.l.b16 %v1100
        %v1140 = vunpack.c.l.b16 %v1101
        %v1141 = vunpack.c.l.b16 %v1102
        %v1142 = vunpack.c.l.b16 %v1103
        %v1143 = vunpack.c.l.b16 %v1104
        %v1144 = vunpack.c.l.b16 %v1105
        %v1145 = vunpack.c.l.b16 %v1106
        %v1146 = vunpack.c.l.b16 %v1107
        %v1147 = vpack.c.b16 %v1132, %v1131
        %v1148 = vpack.c.b16 %v1134, %v1133
        %v1149 = vpack.c.b16 %v1136, %v1135
        %v1150 = vpack.c.b16 %v1138, %v1137
        %v1151 = vpack.c.b16 %v1140, %v1139
        %v1152 = vpack.c.b16 %v1142, %v1141
        %v1153 = vpack.c.b16 %v1144, %v1143
        %v1154 = vpack.c.b16 %v1146, %v1145
        %1163 = vmatprep.subr.bf16.mxu0 0
        %1164 = vmatpush1.bf16.msra.mxu0 %v1154
        %1165 = vmatprep.subr.bf16.mxu0 0
        %1166 = vmatpush1.bf16.msra.mxu0 %v1153
        %1167 = vmatprep.subr.bf16.mxu0 0
        %1168 = vmatpush1.bf16.msra.mxu0 %v1152
        %1169 = vmatprep.subr.bf16.mxu0 0
        %1170 = vmatpush1.bf16.msra.mxu0 %v1151
        %1171 = vmatprep.subr.bf16.mxu0 0
        %1172 = vmatpush1.bf16.msra.mxu0 %v1150
        %1173 = vmatprep.subr.bf16.mxu0 0
        %1174 = vmatpush1.bf16.msra.mxu0 %v1149
        %1175 = vmatprep.subr.bf16.mxu0 0
        %1176 = vmatpush1.bf16.msra.mxu0 %v1148
        %1177 = vmatprep.subr.bf16.mxu0 0
        %1178 = vmatpush1.bf16.msra.mxu0 %v1147
        %1179 = vmatprep.subr.bf16.mxu0 0
        %1180 = vmatpush2.bf16.msra.mxu0 0
        %1181 = vmatprep.subr.bf16.mxu0 0
        %1182 = vmatpush2.bf16.msra.mxu0 0
        %1183 = vmatprep.subr.bf16.mxu0 0
        %1184 = vmatpush2.bf16.msra.mxu0 0
        %1185 = vmatprep.subr.bf16.mxu0 0
        %1186 = vmatpush2.bf16.msra.mxu0 0
        %1187 = vmatprep.subr.bf16.mxu0 0
        %1188 = vmatpush2.bf16.msra.mxu0 0
        %1189 = vmatprep.subr.bf16.mxu0 0
        %1190 = vmatpush2.bf16.msra.mxu0 0
        %1191 = vmatprep.subr.bf16.mxu0 0
        %1192 = vmatpush2.bf16.msra.mxu0 0
        %1193 = vmatprep.subr.bf16.mxu0 0
        %1194 = vmatpush2.bf16.msra.mxu0 0
        %1195 = vmatprep.mubr.bf16.mxu0 0
        %1196 = vmatmul.mubr.bf16.gmra.mxu0 %v1090
        %v1197 = vpop.f32.mrf.mxu0
        %v1198 = vadd.f32 %v1113, %v1197
        %v1199 = vpop.f32.mrf.mxu0
        %v1200 = vpop.f32.mrf.mxu0
        %v1201 = vadd.f32 %v1113, %v1200
        %v1202 = vpop.f32.mrf.mxu0
        %1203 = vmatprep.mubr.bf16.mxu0 0
        %1204 = vmatmul.mubr.bf16.gmra.mxu0 %v1091
        %v1205 = vpop.f32.mrf.mxu0
        %v1206 = vadd.f32 %v1113, %v1205
        %v1207 = vpop.f32.mrf.mxu0
        %v1208 = vpop.f32.mrf.mxu0
        %v1209 = vadd.f32 %v1113, %v1208
        %v1210 = vpop.f32.mrf.mxu0
        %1211 = vdwg.mxu0
        %1212 = vst [vmem:[%s298] sm:$0xff] %v1198
        %1213 = vst [vmem:[%s298 + $0x8] sm:$0xff] %v1201
        %1214 = vst [vmem:[%s298 + $0x10] sm:$0xff] %v1206
        %1215 = vst [vmem:[%s298 + $0x18] sm:$0xff] %v1209
        %v1216 = vmax.f32 %v1198, %v1201
        %v1217 = vmax.f32 %v1206, %v1209
        %v1218 = vmax.f32 %v1216, %v1217
        %v1219 = vrot.slane %v1218, 4
        %v1220 = vmax.f32 %v1218, %v1219
        %v1221 = vrot.slane %v1220, 2
        %v1222 = vmax.f32 %v1220, %v1221
        %v1223 = vrot.slane %v1222, 1
        %v1224 = vmax.f32 %v1222, %v1223
        %v1225 = vld [vmem:[#allocation2] sm:$0x1]
        %v1226 = vmax.f32 %v1225, %v1224
        %v1227 = vld [vmem:[#allocation3] sm:$0x1]
        %v1228 = vsub.f32 %v1225, %v1226
        %v1229 = vmul.f32 %v1228, 1.442695
        %v1230 = vpow.pop %v1229
        %v1231 = vmul.f32 %v1227, %v1230
        %v1233 = vlaneseq
        %v1234 = vshrl.u32 %v1233, 7
        %v1235 = vsub.s32 0, %v1234
        %v1236 = vrot.slane %v1226, %v1235
        %v1238 = vsub.f32 %v1198, %v1236
        %v1239 = vsub.f32 %v1201, %v1236
        %v1240 = vsub.f32 %v1206, %v1236
        %v1241 = vsub.f32 %v1209, %v1236
        %v1242 = vmul.f32 %v1238, 1.442695
        %v1243 = vpow.pop %v1242
        %v1244 = vmul.f32 %v1239, 1.442695
        %v1245 = vpow.pop %v1244
        %v1246 = vmul.f32 %v1240, 1.442695
        %v1247 = vpow.pop %v1246
        %v1248 = vmul.f32 %v1241, 1.442695
        %v1249 = vpow.pop %v1248
        %v1250 = vadd.f32 %v1243, %v1245
        %v1251 = vadd.f32 %v1250, %v1247
        %v1252 = vadd.f32 %v1251, %v1249
        %v1253 = vrot.slane %v1252, 4
        %v1254 = vadd.f32 %v1252, %v1253
        %v1255 = vrot.slane %v1254, 2
        %v1256 = vadd.f32 %v1254, %v1255
        %v1257 = vrot.slane %v1256, 1
        %v1258 = vadd.f32 %v1256, %v1257
        %v1259 = vadd.f32 %v1231, %v1258
        %1260 = vst [vmem:[#allocation3] sm:$0x1] %v1259
        %1261 = vst [vmem:[#allocation2] sm:$0x1] %v1226
        %p1262 = scmp.eq.s32.totalorder %s24, 3
        // Predicated region
        $region53: #{tpu_custom_call.1} parent=47 // pred_check
          %p1263 = pneg %p1262
        $region54: #{tpu_custom_call.1} parent=47 // pred_check_branch
          %1265 = sbr.rel (%p1263) target = $region56
        $region55: #{tpu_custom_call.1} parent=47 // pred_region
          %v1266 = vld [vmem:[#allocation2] sm:$0x1]
          %v1267 = vld [vmem:[#allocation3] sm:$0x1]
          %v1268 = vlog2.pop %v1267
          %v1269 = vmul.f32 %v1268, 0.6931472
          %v1270 = vadd.f32 %v1266, %v1269
          %1271 = vst [vmem:[#allocation6] sm:$0x1] %v1270
        $region56: #{tpu_custom_call.1} parent=47 // pred_fallthru
          _
        %s1272 = sand.u32 %s184, 1
        %s1273 = scalar_lea.sflag [#allocation5], %s1272
        %s1274 = sand.u32 %s184, 1
        %s1275 = smul.addr %s1274, 32
        %s1276 = scalar_lea.vmem [#allocation4], %s1275
        // Predicated region
        $region57: #{tpu_custom_call.1} parent=47 // pred_check
          %p1277 = pneg %p194
        $region58: #{tpu_custom_call.1} parent=47 // pred_check_branch
          %1279 = sbr.rel (%p1277) target = $region60
        $region59: #{tpu_custom_call.1} parent=47 // pred_region
          %s1280 = smul.u32 4, %s24
          %s1282 = ssub.s32 512, 512
          %1283 = vsyncadd %s1273, %s1282
          %s1284 = smul.addr %s1280, 128
          %s1285 = scalar_lea.hbm %s7, %s1284
          %s1286 = sshll.u32 %s1276, 4
          %s1287 = int_to_ptr.vmem [resolvable:$true] %s1286
          %1292 = dma.vmem_to_hbm [thread:$0]  %s1287, 512, %s1285, %s1273, 128, 128, 8
        $region60: #{tpu_custom_call.1} parent=47 // pred_fallthru
          _
        // Predicated region
        $region61: #{tpu_custom_call.1} parent=47 // pred_check
          %p1293 = pneg %p215
        $region62: #{tpu_custom_call.1} parent=47 // pred_check_branch
          %1295 = sbr.rel (%p1293) target = $region64
        $region63: #{tpu_custom_call.1} parent=47 // pred_region
          %s1297 = ssub.s32 16, 16
          %1298 = vsyncadd [#allocation7], %s1297
          %s1300 = sshll.u32 [#allocation6], 4
          %s1301 = int_to_ptr.vmem [resolvable:$true] %s1300
          %1303 = dma.vmem_to_hbm [thread:$0]  %s1301, 16, %s8, [#allocation7]
        $region64: #{tpu_custom_call.1} parent=47 // pred_fallthru
          _
        // Predicated region
        $region65: #{tpu_custom_call.1} parent=47 // pred_check
          %p1304 = pneg %p215
        $region66: #{tpu_custom_call.1} parent=47 // pred_check_branch
          %1306 = sbr.rel (%p1304) target = $region68
        $region67: #{tpu_custom_call.1} parent=47 // pred_region
          %1307 = dma.done [#allocation7], 16
        $region68: #{tpu_custom_call.1} parent=47 // pred_fallthru
          _
      $region48: #{tpu_custom_call.1} parent=5 // pred_fallthru
        _
      %p1308 = scmp.le.s32.totalorder 2, %s19
      // Predicated region
      $region69: #{tpu_custom_call.1} parent=5 // pred_check
        %p1309 = pneg %p1308
      $region70: #{tpu_custom_call.1} parent=5 // pred_check_branch
        %1311 = sbr.rel (%p1309) target = $region72
      $region71: #{tpu_custom_call.1} parent=5 // pred_region
        %s1312 = ssub.s32 %s19, 2
        // Predicated region
        $region73: #{tpu_custom_call.1} parent=71 // pred_check
          %p1313 = pneg %p200
        $region74: #{tpu_custom_call.1} parent=71 // pred_check_branch
          %1315 = sbr.rel (%p1313) target = $region76
        $region75: #{tpu_custom_call.1} parent=71 // pred_region
          %s1316 = sand.u32 %s185, 1
          %s1317 = scalar_lea.sflag [#allocation5], %s1316
          %s1318 = sand.u32 %s185, 1
          %s1319 = smul.addr %s1318, 32
          %s1320 = scalar_lea.vmem [#allocation4], %s1319
          %1321 = dma.done %s1317, 512
        $region76: #{tpu_custom_call.1} parent=71 // pred_fallthru
          _
      $region72: #{tpu_custom_call.1} parent=5 // pred_fallthru
        _
    $region6: #{tpu_custom_call.1} parent=1 // loop_footer
      %s23 = sadd.s32 1, %s19
    $region7: #{tpu_custom_call.1} parent=1 // loop_footer_branch
      %18 = sbr.rel target = $region3
    $region8: #{tpu_custom_call.1} parent=1 // loop_exit
      _
    %1322 = vsyncpa [#allocation5], 1
    %s1323 = scalar_lea.sflag [#allocation5], 1
    %1324 = vsyncpa %s1323, 1
    %1325 = vsyncpa [#allocation7], 1

</llo_original>
